<compile_context>
chip_gen: v7x
topology: tpu7x:2x2x1
jax: 0.10.0
libtpu: 0.0.40
codegen_flags: <defaults>
</compile_context>

<pallas_src>
import jax
import jax.numpy as jnp
from jax.experimental import pallas as pl
from jax.experimental.pallas import tpu as pltpu

NEG_SLOPE = 0.1
OUT_LANES = 128   # lane-dense output slab; column 0 holds the result
PO_BLOCK = 8      # POs per grid step (multiple of 8 -> full-sublane, unmasked stores)


def _leaky_relu(x):
    return jnp.where(x > 0, x, NEG_SLOPE * x)


def path_model_kernel(feat_ref, w1_ref, b1_ref, w2_ref, b2_ref, w3_ref, b3_ref,
                      out_ref):
    """One grid step == PO_BLOCK POs. feat_ref: (PO_BLOCK, P, F) bf16."""
    po_block, n_paths, f = feat_ref.shape
    hidden = w1_ref.shape[1]

    # Flatten POs x paths so the MXU sees M = PO_BLOCK * n_paths rows per matmul.
    x = feat_ref[...].reshape(po_block * n_paths, f)                       # bf16 (M, F)

    # Layer 1: bf16 matmul, f32 accumulate; bias / LeakyReLU in f32.
    h = jnp.dot(x, w1_ref[...], preferred_element_type=jnp.float32) + b1_ref[...]
    h = _leaky_relu(h)

    # Layer 2: cast activations to bf16 only for the MXU, keep elementwise math f32.
    h = jnp.dot(h.astype(w2_ref.dtype), w2_ref[...],
                preferred_element_type=jnp.float32) + b2_ref[...]
    h = _leaky_relu(h)

    # Layer 3: Linear(H, 1) as a lane reduction (not an N=1 matmul).
    h3 = h.reshape(po_block, n_paths, hidden)                              # f32
    y = jnp.sum(h3 * w3_ref[...], axis=-1)                                 # (PO_BLOCK, P)

    # Per-PO max over path delays (+ scalar bias), lane-dense full-tile store.
    m = jnp.max(y, axis=-1, keepdims=True) + b3_ref[...]                   # (PO_BLOCK, 1)
    out_ref[...] = jnp.broadcast_to(m, (po_block, OUT_LANES)).astype(out_ref.dtype)


def path_model_forward(pos_feat, params):
    """pos_feat: (num_POs, num_paths, infeat_dim) f32. Returns (num_POs, 1) f32."""
    w1, b1, w2, b2, w3, b3 = params
    num_pos, num_paths, infeat_dim = pos_feat.shape
    hidden_dim = w1.shape[1]

    # Pad paths to a multiple of 8 by replicating the last path (max-invariant),
    # and POs to a multiple of PO_BLOCK by replicating the last PO (sliced off below).
    pad_paths = (-num_paths) % 8
    if pad_paths:
        pos_feat = jnp.concatenate(
            [pos_feat, jnp.repeat(pos_feat[:, -1:, :], pad_paths, axis=1)], axis=1)
    pad_pos = (-num_pos) % PO_BLOCK
    if pad_pos:
        pos_feat = jnp.concatenate(
            [pos_feat, jnp.repeat(pos_feat[-1:], pad_pos, axis=0)], axis=0)
    num_pos_p, num_paths_p, _ = pos_feat.shape

    # bf16 feature / weight streaming (kernel is HBM-bound on features).
    feat_b = pos_feat.astype(jnp.bfloat16)
    w1_b = w1.astype(jnp.bfloat16)
    w2_b = w2.astype(jnp.bfloat16)

    full2d = lambda shape: pl.BlockSpec(shape, lambda i: (0, 0))

    flops = 2 * num_pos_p * num_paths_p * (
        infeat_dim * hidden_dim + hidden_dim * hidden_dim + hidden_dim)
    bytes_accessed = (feat_b.size * 2 + w1_b.size * 2 + w2_b.size * 2
                      + (b1.size + b2.size + w3.size + b3.size) * 4
                      + num_pos_p * OUT_LANES * 4)

    out_padded = pl.pallas_call(
        path_model_kernel,
        out_shape=jax.ShapeDtypeStruct((num_pos_p, OUT_LANES), jnp.float32),
        grid_spec=pl.GridSpec(
            grid=(num_pos_p // PO_BLOCK,),
            in_specs=[
                # per-step feature tile: PO_BLOCK POs, all paths, all features
                pl.BlockSpec((PO_BLOCK, num_paths_p, infeat_dim),
                             lambda i: (i, 0, 0)),
                full2d((infeat_dim, hidden_dim)),   # w1 (bf16)
                full2d((1, hidden_dim)),            # b1 (f32)
                full2d((hidden_dim, hidden_dim)),   # w2 (bf16)
                full2d((1, hidden_dim)),            # b2 (f32)
                full2d((1, hidden_dim)),            # w3 stored transposed, row vec (f32)
                full2d((1, 1)),                     # b3 (f32)
            ],
            # per-step output tile -> unmasked full-tile stores, pipelined writeback
            out_specs=pl.BlockSpec((PO_BLOCK, OUT_LANES), lambda i: (i, 0)),
        ),
        compiler_params=pltpu.CompilerParams(
            dimension_semantics=("parallel",)),
        cost_estimate=pl.CostEstimate(flops=flops, transcendentals=0,
                                      bytes_accessed=bytes_accessed),
    )(feat_b, w1_b, b1, w2_b, b2, w3, b3)

    return out_padded[:num_pos, :1]   # (num_POs, 1), matches PyTorch rst


def init_params(key, infeat_dim, hidden_dim):
    """Deterministic synthetic MLP parameters (weights stored as (in, out))."""
    k1, k2, k3, k4, k5, k6 = jax.random.split(key, 6)
    scale1 = 1.0 / jnp.sqrt(infeat_dim)
    scale2 = 1.0 / jnp.sqrt(hidden_dim)
    w1 = jax.random.normal(k1, (infeat_dim, hidden_dim), jnp.float32) * scale1
    b1 = jax.random.normal(k2, (1, hidden_dim), jnp.float32) * 0.1
    w2 = jax.random.normal(k3, (hidden_dim, hidden_dim), jnp.float32) * scale2
    b2 = jax.random.normal(k4, (1, hidden_dim), jnp.float32) * 0.1
    w3 = jax.random.normal(k5, (1, hidden_dim), jnp.float32) * scale2  # (H,1) transposed
    b3 = jax.random.normal(k6, (1, 1), jnp.float32) * 0.1
    return (w1, b1, w2, b2, w3, b3)


def reference_forward(pos_feat, params):
    """Pure-JAX reference mirroring the PyTorch loop, with the same bf16 MXU feed."""
    w1, b1, w2, b2, w3, b3 = params
    feat_b = pos_feat.astype(jnp.bfloat16)
    w1_b = w1.astype(jnp.bfloat16)
    w2_b = w2.astype(jnp.bfloat16)

    def one_po(feat):
        h = jnp.dot(feat, w1_b, preferred_element_type=jnp.float32) + b1
        h = _leaky_relu(h)
        h = jnp.dot(h.astype(jnp.bfloat16), w2_b,
                    preferred_element_type=jnp.float32) + b2
        h = _leaky_relu(h)
        y = jnp.sum(h * w3, axis=-1) + b3[0, 0]   # (P,)
        return jnp.max(y)

    return jax.vmap(one_po)(feat_b)[:, None]   # (num_POs, 1)


if __name__ == "__main__":
    num_POs, num_paths, infeat_dim, hidden_dim = 16, 16, 32, 32

    key = jax.random.PRNGKey(0)
    k_feat, k_params = jax.random.split(key)
    pos_feat = jax.random.normal(k_feat, (num_POs, num_paths, infeat_dim), jnp.float32)
    params = init_params(k_params, infeat_dim, hidden_dim)

    out = jax.block_until_ready(path_model_forward(pos_feat, params))
    ref = jax.block_until_ready(reference_forward(pos_feat, params))

    assert out.shape == (num_POs, 1), out.shape
    assert jnp.allclose(out, ref, atol=1e-3, rtol=1e-3), (out, ref)

    print("KERNEL_OK")
</pallas_src>

<mosaic_0001>
module attributes {stable_mosaic.version = 11 : i64} {
  func.func @path_model_kernel(%arg0: i32, %arg1: memref<8x16x32xbf16, #tpu.memory_space<vmem>>, %arg2: memref<32x32xbf16, #tpu.memory_space<vmem>>, %arg3: memref<1x32xf32, #tpu.memory_space<vmem>>, %arg4: memref<32x32xbf16, #tpu.memory_space<vmem>>, %arg5: memref<1x32xf32, #tpu.memory_space<vmem>>, %arg6: memref<1x32xf32, #tpu.memory_space<vmem>>, %arg7: memref<1x1xf32, #tpu.memory_space<vmem>>, %arg8: memref<8x128xf32, #tpu.memory_space<vmem>>) attributes {dimension_semantics = [#tpu.dimension_semantics<parallel>], iteration_bounds = array<i64: 2>, scalar_prefetch = 0 : i64, scratch_operands = 0 : i64, tpu.core_type = #tpu.core_type<tc>, window_params = [{transform_indices = @transform_0, window_bounds = array<i64: 8, 16, 32>}, {pipeline_mode = #tpu.pipeline_mode<synchronous>, transform_indices = @transform_1, window_bounds = array<i64: 32, 32>}, {pipeline_mode = #tpu.pipeline_mode<synchronous>, transform_indices = @transform_2, window_bounds = array<i64: 1, 32>}, {pipeline_mode = #tpu.pipeline_mode<synchronous>, transform_indices = @transform_3, window_bounds = array<i64: 32, 32>}, {pipeline_mode = #tpu.pipeline_mode<synchronous>, transform_indices = @transform_4, window_bounds = array<i64: 1, 32>}, {pipeline_mode = #tpu.pipeline_mode<synchronous>, transform_indices = @transform_5, window_bounds = array<i64: 1, 32>}, {pipeline_mode = #tpu.pipeline_mode<synchronous>, transform_indices = @transform_6, window_bounds = array<i64: 1, 1>}, {transform_indices = @transform_7, window_bounds = array<i64: 8, 128>}]} {
    %c0 = arith.constant 0 : index
    %c0_0 = arith.constant 0 : index
    %c0_1 = arith.constant 0 : index
    %0 = vector.load %arg1[%c0, %c0_0, %c0_1] : memref<8x16x32xbf16, #tpu.memory_space<vmem>>, vector<8x16x32xbf16>
    %1 = vector.shape_cast %0 : vector<8x16x32xbf16> to vector<128x32xbf16>
    %c0_2 = arith.constant 0 : index
    %c0_3 = arith.constant 0 : index
    %2 = vector.load %arg2[%c0_2, %c0_3] : memref<32x32xbf16, #tpu.memory_space<vmem>>, vector<32x32xbf16>
    %cst = arith.constant dense<0.000000e+00> : vector<128x32xf32>
    %3 = tpu.matmul %1, %2, %cst {dimension_numbers = #tpu.dot_dimension_numbers<[1], [0], [0], [1], [0, 0, 1, 1], [], []>} : vector<128x32xbf16>, vector<32x32xbf16>, vector<128x32xf32> -> vector<128x32xf32>
    %c0_4 = arith.constant 0 : index
    %c0_5 = arith.constant 0 : index
    %4 = vector.load %arg3[%c0_4, %c0_5] : memref<1x32xf32, #tpu.memory_space<vmem>>, vector<1x32xf32>
    %5 = vector.broadcast %4 : vector<1x32xf32> to vector<128x32xf32>
    %6 = arith.addf %3, %5 : vector<128x32xf32>
    %cst_6 = arith.constant 0.000000e+00 : f32
    %7 = vector.broadcast %cst_6 : f32 to vector<128x32xf32>
    %8 = arith.cmpf ogt, %6, %7 : vector<128x32xf32>
    %cst_7 = arith.constant 1.000000e-01 : f32
    %9 = vector.broadcast %cst_7 : f32 to vector<128x32xf32>
    %10 = arith.mulf %9, %6 : vector<128x32xf32>
    %11 = arith.select %8, %6, %10 : vector<128x32xi1>, vector<128x32xf32>
    %12 = arith.truncf %11 : vector<128x32xf32> to vector<128x32xbf16>
    %c0_8 = arith.constant 0 : index
    %c0_9 = arith.constant 0 : index
    %13 = vector.load %arg4[%c0_8, %c0_9] : memref<32x32xbf16, #tpu.memory_space<vmem>>, vector<32x32xbf16>
    %cst_10 = arith.constant dense<0.000000e+00> : vector<128x32xf32>
    %14 = tpu.matmul %12, %13, %cst_10 {dimension_numbers = #tpu.dot_dimension_numbers<[1], [0], [0], [1], [0, 0, 1, 1], [], []>} : vector<128x32xbf16>, vector<32x32xbf16>, vector<128x32xf32> -> vector<128x32xf32>
    %c0_11 = arith.constant 0 : index
    %c0_12 = arith.constant 0 : index
    %15 = vector.load %arg5[%c0_11, %c0_12] : memref<1x32xf32, #tpu.memory_space<vmem>>, vector<1x32xf32>
    %16 = vector.broadcast %15 : vector<1x32xf32> to vector<128x32xf32>
    %17 = arith.addf %14, %16 : vector<128x32xf32>
    %cst_13 = arith.constant 0.000000e+00 : f32
    %18 = vector.broadcast %cst_13 : f32 to vector<128x32xf32>
    %19 = arith.cmpf ogt, %17, %18 : vector<128x32xf32>
    %cst_14 = arith.constant 1.000000e-01 : f32
    %20 = vector.broadcast %cst_14 : f32 to vector<128x32xf32>
    %21 = arith.mulf %20, %17 : vector<128x32xf32>
    %22 = arith.select %19, %17, %21 : vector<128x32xi1>, vector<128x32xf32>
    %23 = vector.shape_cast %22 : vector<128x32xf32> to vector<8x16x32xf32>
    %c0_15 = arith.constant 0 : index
    %c0_16 = arith.constant 0 : index
    %24 = vector.load %arg6[%c0_15, %c0_16] : memref<1x32xf32, #tpu.memory_space<vmem>>, vector<1x32xf32>
    %25 = vector.shape_cast %24 : vector<1x32xf32> to vector<1x1x32xf32>
    %26 = vector.broadcast %25 : vector<1x1x32xf32> to vector<8x16x32xf32>
    %27 = arith.mulf %23, %26 : vector<8x16x32xf32>
    %cst_17 = arith.constant dense<0.000000e+00> : vector<8x16xf32>
    %28 = vector.multi_reduction <add>, %27, %cst_17 [2] : vector<8x16x32xf32> to vector<8x16xf32>
    %cst_18 = arith.constant dense<0xFF800000> : vector<8xf32>
    %29 = vector.multi_reduction <maximumf>, %28, %cst_18 [1] : vector<8x16xf32> to vector<8xf32>
    %30 = vector.shape_cast %29 : vector<8xf32> to vector<8x1xf32>
    %c0_19 = arith.constant 0 : index
    %c0_20 = arith.constant 0 : index
    %31 = vector.load %arg7[%c0_19, %c0_20] : memref<1x1xf32, #tpu.memory_space<vmem>>, vector<1x1xf32>
    %32 = vector.broadcast %31 : vector<1x1xf32> to vector<8x1xf32>
    %33 = arith.addf %30, %32 : vector<8x1xf32>
    %34 = vector.shape_cast %33 : vector<8x1xf32> to vector<8x1xf32>
    %35 = vector.broadcast %34 : vector<8x1xf32> to vector<8x128xf32>
    %c0_21 = arith.constant 0 : index
    %c0_22 = arith.constant 0 : index
    %36 = vector.load %arg8[%c0_21, %c0_22] : memref<8x128xf32, #tpu.memory_space<vmem>>, vector<8x128xf32>
    tpu.vector_store %arg8[%c0_21, %c0_22], %35 {strides = array<i32>} : memref<8x128xf32, #tpu.memory_space<vmem>>, vector<8x128xf32>,
    return
  }
  func.func @transform_0(%arg0: i32) -> (i32, i32, i32) {
    %c0_i32 = arith.constant 0 : i32
    %c0_i32_0 = arith.constant 0 : i32
    %c0_i32_1 = arith.constant 0 : i32
    return %arg0, %c0_i32, %c0_i32_0 : i32, i32, i32
  }
  func.func @transform_1(%arg0: i32) -> (i32, i32) {
    %c0_i32 = arith.constant 0 : i32
    %c0_i32_0 = arith.constant 0 : i32
    %c0_i32_1 = arith.constant 0 : i32
    return %c0_i32, %c0_i32_0 : i32, i32
  }
  func.func @transform_2(%arg0: i32) -> (i32, i32) {
    %c0_i32 = arith.constant 0 : i32
    %c0_i32_0 = arith.constant 0 : i32
    %c0_i32_1 = arith.constant 0 : i32
    return %c0_i32, %c0_i32_0 : i32, i32
  }
  func.func @transform_3(%arg0: i32) -> (i32, i32) {
    %c0_i32 = arith.constant 0 : i32
    %c0_i32_0 = arith.constant 0 : i32
    %c0_i32_1 = arith.constant 0 : i32
    return %c0_i32, %c0_i32_0 : i32, i32
  }
  func.func @transform_4(%arg0: i32) -> (i32, i32) {
    %c0_i32 = arith.constant 0 : i32
    %c0_i32_0 = arith.constant 0 : i32
    %c0_i32_1 = arith.constant 0 : i32
    return %c0_i32, %c0_i32_0 : i32, i32
  }
  func.func @transform_5(%arg0: i32) -> (i32, i32) {
    %c0_i32 = arith.constant 0 : i32
    %c0_i32_0 = arith.constant 0 : i32
    %c0_i32_1 = arith.constant 0 : i32
    return %c0_i32, %c0_i32_0 : i32, i32
  }
  func.func @transform_6(%arg0: i32) -> (i32, i32) {
    %c0_i32 = arith.constant 0 : i32
    %c0_i32_0 = arith.constant 0 : i32
    %c0_i32_1 = arith.constant 0 : i32
    return %c0_i32, %c0_i32_0 : i32, i32
  }
  func.func @transform_7(%arg0: i32) -> (i32, i32) {
    %c0_i32 = arith.constant 0 : i32
    %c0_i32_0 = arith.constant 0 : i32
    return %arg0, %c0_i32 : i32, i32
  }
}

</mosaic_0001>

<llo_original>
// kernel: tpu_custom_call.1
$region0: #{tpu_custom_call.1}
  #allocation0 [shape = 'u32[]', space=smem, size = 0x4, offset = 0x4, fixed_abs, tag = 'smem constant byte address 0x4 - core index']
  #allocation1 [shape = 'u32[144,128]{1,0:T(1,128)}', space=vmem, size = 0x12000, scoped, tag = 'internal scratch']
  #allocation2 [shape = 'f32[1,1]{1,0:T(1,128)S(1)}', space=vmem, size = 0x200, scoped, tag = 'scoped memory for tpu_custom_call.1']
  %s0 = inlined_call_operand.hbm [shape: bf16[16,16,32], index: 0, kind: input, shape index: {}]
  %s1 = inlined_call_operand.hbm [shape: bf16[32,32], index: 1, kind: input, shape index: {}]
  %s2 = inlined_call_operand.vmem [shape: f32[1,32], index: 2, kind: input, shape index: {}]
  %s3 = inlined_call_operand.hbm [shape: bf16[32,32], index: 3, kind: input, shape index: {}]
  %s4 = inlined_call_operand.vmem [shape: f32[1,32], index: 4, kind: input, shape index: {}]
  %s5 = inlined_call_operand.vmem [shape: f32[1,32], index: 5, kind: input, shape index: {}]
  %s6 = inlined_call_operand.<no memory space> [shape: f32[1,1], index: 6, kind: input, shape index: {}]
  %s7 = inlined_call_operand.hbm [shape: f32[16,128], index: 7, kind: output, shape index: {}]
  %s8 = sld [smem:[#allocation0]]
  $region73: #{tpu_custom_call.1} parent=0
    _
  %s10 = ssub.s32 1, %s8
  %s11 = scalar_select 0, %s10, %s8
  %v12 = vstv %s6
  %13 = vst [vmem:[#allocation2] sm:$0x1] %v12
  $region1: #{tpu_custom_call.1} parent=0
    #allocation3 [shape = 'u8[65536]{0}', space=vmem, size = 0x10000, scoped, tag = 'input window, operand 0']
    #allocation4 [shape = 's32[2]{0}', space=sflag, size = 0x8, scoped, tag = 'scoped memory for tpu_custom_call.1']
    #allocation5 [shape = 's32[2]{0}', space=sflag, size = 0x8, scoped, tag = 'scoped memory for tpu_custom_call.1']
    #allocation6 [shape = 'u8[8192]{0}', space=vmem, size = 0x2000, scoped, tag = 'input window, operand 1, single buffered']
    #allocation7 [shape = 's32[1]{0}', space=sflag, size = 0x4, scoped, tag = 'scoped memory for tpu_custom_call.1']
    #allocation8 [shape = 'u8[8192]{0}', space=vmem, size = 0x2000, scoped, tag = 'input window, operand 3, single buffered']
    #allocation9 [shape = 'u8[8192]{0}', space=vmem, size = 0x2000, scoped, tag = 'output window, operand 0']
    %14 = vsyncpa [#allocation4], 0
    %s15 = scalar_lea.sflag [#allocation4], 1
    %16 = vsyncpa %s15, 0
    %17 = vsyncpa [#allocation7], 0
    %18 = vsyncpa [#allocation5], 0
    %s19 = scalar_lea.sflag [#allocation5], 1
    %20 = vsyncpa %s19, 0
    loop: start=0, step=1, limit=4
    $region2: #{tpu_custom_call.1} parent=1 // loop_pre_header
      _
    $region3: #{tpu_custom_call.1} parent=1 // loop_header
      %s22 = sphi 0, %s26
      %p23 = scmp.ge.s32.totalorder %s22, 4
      %s32 = sphi 0, %s34
      %s35 = sphi 0, %s32
      %s36 = sphi 0, %s35
      %s52 = sphi 0, %s36
      %s56 = sphi 0, %s56
      %s58 = sphi 0, %s56
      %s59 = sphi 0, %s58
      %s73 = sphi 0, %s59
      %s77 = sphi 0, %s77
      %s79 = sphi 0, %s77
      %s80 = sphi 0, %s79
      %s94 = sphi 0, %s80
      %s98 = sphi 0, %s98
      %s100 = sphi 0, %s98
      %s101 = sphi 0, %s100
      %s115 = sphi 0, %s101
      %s119 = sphi 0, %s119
      %s121 = sphi 0, %s119
      %s122 = sphi 0, %s121
      %s136 = sphi 0, %s122
      %s140 = sphi 0, %s140
      %s142 = sphi 0, %s140
      %s143 = sphi 0, %s142
      %s157 = sphi 0, %s143
      %s161 = sphi 0, %s161
      %s163 = sphi 0, %s161
      %s164 = sphi 0, %s163
      %s178 = sphi 0, %s164
      %s184 = sphi 0, %s186
      %s187 = sphi 0, %s184
      %s188 = sphi 0, %s187
      %s204 = sphi 0, %s188
    $region4: #{tpu_custom_call.1} parent=1 // loop_header_branch
      %25 = sbr.rel (%p23) target = $region8
    $region5: #{tpu_custom_call.1} parent=1 // loop_body
      %s27 = ssub.s32 %s22, 1
      %s28 = ssub.s32 %s22, 2
      %s29 = sadd.s32 %s22, 1
      %s30 = ssub.s32 %s22, %s29
      %p31 = scmp.eq.s32.totalorder %s30, 0
      %s33 = sadd.s32 %s32, 1
      %s34 = scalar_select %p31, %s32, %s33
      %p37 = pneg %p31
      %p38 = scmp.eq.s32.totalorder %s22, 1
      %p39 = por %p37, %p38
      %p40 = scmp.ne.s32.totalorder %s32, %s35
      %p41 = scmp.eq.s32.totalorder %s22, 0
      %p42 = por %p40, %p41
      %p43 = scmp.ne.s32.totalorder %s32, %s35
      %p44 = scmp.eq.s32.totalorder %s27, 1
      %p45 = por %p43, %p44
      %p46 = scmp.ne.s32.totalorder %s35, %s36
      %p47 = scmp.eq.s32.totalorder %s27, 0
      %p48 = por %p46, %p47
      %p49 = scmp.ne.s32.totalorder %s35, %s36
      %p50 = scmp.eq.s32.totalorder %s28, 1
      %p51 = por %p49, %p50
      %p53 = scmp.ne.s32.totalorder %s36, %s52
      %p54 = scmp.eq.s32.totalorder %s28, 0
      %p55 = por %p53, %p54
      %s57 = sadd.s32 %s56, 1
      %p60 = scmp.eq.s32.totalorder %s22, 1
      %p61 = scmp.ne.s32.totalorder %s56, %s58
      %p62 = scmp.eq.s32.totalorder %s22, 0
      %p63 = por %p61, %p62
      %p64 = scmp.ne.s32.totalorder %s56, %s58
      %p65 = scmp.eq.s32.totalorder %s27, 1
      %p66 = por %p64, %p65
      %p67 = scmp.ne.s32.totalorder %s58, %s59
      %p68 = scmp.eq.s32.totalorder %s27, 0
      %p69 = por %p67, %p68
      %p70 = scmp.ne.s32.totalorder %s58, %s59
      %p71 = scmp.eq.s32.totalorder %s28, 1
      %p72 = por %p70, %p71
      %p74 = scmp.ne.s32.totalorder %s59, %s73
      %p75 = scmp.eq.s32.totalorder %s28, 0
      %p76 = por %p74, %p75
      %s78 = sadd.s32 %s77, 1
      %p81 = scmp.eq.s32.totalorder %s22, 1
      %p82 = scmp.ne.s32.totalorder %s77, %s79
      %p83 = scmp.eq.s32.totalorder %s22, 0
      %p84 = por %p82, %p83
      %p85 = scmp.ne.s32.totalorder %s77, %s79
      %p86 = scmp.eq.s32.totalorder %s27, 1
      %p87 = por %p85, %p86
      %p88 = scmp.ne.s32.totalorder %s79, %s80
      %p89 = scmp.eq.s32.totalorder %s27, 0
      %p90 = por %p88, %p89
      %p91 = scmp.ne.s32.totalorder %s79, %s80
      %p92 = scmp.eq.s32.totalorder %s28, 1
      %p93 = por %p91, %p92
      %p95 = scmp.ne.s32.totalorder %s80, %s94
      %p96 = scmp.eq.s32.totalorder %s28, 0
      %p97 = por %p95, %p96
      %s99 = sadd.s32 %s98, 1
      %p102 = scmp.eq.s32.totalorder %s22, 1
      %p103 = scmp.ne.s32.totalorder %s98, %s100
      %p104 = scmp.eq.s32.totalorder %s22, 0
      %p105 = por %p103, %p104
      %p106 = scmp.ne.s32.totalorder %s98, %s100
      %p107 = scmp.eq.s32.totalorder %s27, 1
      %p108 = por %p106, %p107
      %p109 = scmp.ne.s32.totalorder %s100, %s101
      %p110 = scmp.eq.s32.totalorder %s27, 0
      %p111 = por %p109, %p110
      %p112 = scmp.ne.s32.totalorder %s100, %s101
      %p113 = scmp.eq.s32.totalorder %s28, 1
      %p114 = por %p112, %p113
      %p116 = scmp.ne.s32.totalorder %s101, %s115
      %p117 = scmp.eq.s32.totalorder %s28, 0
      %p118 = por %p116, %p117
      %s120 = sadd.s32 %s119, 1
      %p123 = scmp.eq.s32.totalorder %s22, 1
      %p124 = scmp.ne.s32.totalorder %s119, %s121
      %p125 = scmp.eq.s32.totalorder %s22, 0
      %p126 = por %p124, %p125
      %p127 = scmp.ne.s32.totalorder %s119, %s121
      %p128 = scmp.eq.s32.totalorder %s27, 1
      %p129 = por %p127, %p128
      %p130 = scmp.ne.s32.totalorder %s121, %s122
      %p131 = scmp.eq.s32.totalorder %s27, 0
      %p132 = por %p130, %p131
      %p133 = scmp.ne.s32.totalorder %s121, %s122
      %p134 = scmp.eq.s32.totalorder %s28, 1
      %p135 = por %p133, %p134
      %p137 = scmp.ne.s32.totalorder %s122, %s136
      %p138 = scmp.eq.s32.totalorder %s28, 0
      %p139 = por %p137, %p138
      %s141 = sadd.s32 %s140, 1
      %p144 = scmp.eq.s32.totalorder %s22, 1
      %p145 = scmp.ne.s32.totalorder %s140, %s142
      %p146 = scmp.eq.s32.totalorder %s22, 0
      %p147 = por %p145, %p146
      %p148 = scmp.ne.s32.totalorder %s140, %s142
      %p149 = scmp.eq.s32.totalorder %s27, 1
      %p150 = por %p148, %p149
      %p151 = scmp.ne.s32.totalorder %s142, %s143
      %p152 = scmp.eq.s32.totalorder %s27, 0
      %p153 = por %p151, %p152
      %p154 = scmp.ne.s32.totalorder %s142, %s143
      %p155 = scmp.eq.s32.totalorder %s28, 1
      %p156 = por %p154, %p155
      %p158 = scmp.ne.s32.totalorder %s143, %s157
      %p159 = scmp.eq.s32.totalorder %s28, 0
      %p160 = por %p158, %p159
      %s162 = sadd.s32 %s161, 1
      %p165 = scmp.eq.s32.totalorder %s22, 1
      %p166 = scmp.ne.s32.totalorder %s161, %s163
      %p167 = scmp.eq.s32.totalorder %s22, 0
      %p168 = por %p166, %p167
      %p169 = scmp.ne.s32.totalorder %s161, %s163
      %p170 = scmp.eq.s32.totalorder %s27, 1
      %p171 = por %p169, %p170
      %p172 = scmp.ne.s32.totalorder %s163, %s164
      %p173 = scmp.eq.s32.totalorder %s27, 0
      %p174 = por %p172, %p173
      %p175 = scmp.ne.s32.totalorder %s163, %s164
      %p176 = scmp.eq.s32.totalorder %s28, 1
      %p177 = por %p175, %p176
      %p179 = scmp.ne.s32.totalorder %s164, %s178
      %p180 = scmp.eq.s32.totalorder %s28, 0
      %p181 = por %p179, %p180
      %s182 = ssub.s32 %s22, %s29
      %p183 = scmp.eq.s32.totalorder %s182, 0
      %s185 = sadd.s32 %s184, 1
      %s186 = scalar_select %p183, %s184, %s185
      %p189 = pneg %p183
      %p190 = scmp.eq.s32.totalorder %s22, 1
      %p191 = por %p189, %p190
      %p192 = scmp.ne.s32.totalorder %s184, %s187
      %p193 = scmp.eq.s32.totalorder %s22, 0
      %p194 = por %p192, %p193
      %p195 = scmp.ne.s32.totalorder %s184, %s187
      %p196 = scmp.eq.s32.totalorder %s27, 1
      %p197 = por %p195, %p196
      %p198 = scmp.ne.s32.totalorder %s187, %s188
      %p199 = scmp.eq.s32.totalorder %s27, 0
      %p200 = por %p198, %p199
      %p201 = scmp.ne.s32.totalorder %s187, %s188
      %p202 = scmp.eq.s32.totalorder %s28, 1
      %p203 = por %p201, %p202
      %p205 = scmp.ne.s32.totalorder %s188, %s204
      %p206 = scmp.eq.s32.totalorder %s28, 0
      %p207 = por %p205, %p206
      %p208 = scmp.le.s32.totalorder 1, %s22
      %p209 = scmp.lt.s32.totalorder %s22, 3
      %p210 = pnand %p208, %p209
      %p211 = pneg %p210
      // Predicated region
      $region9: #{tpu_custom_call.1} parent=5 // pred_check
        _
      $region10: #{tpu_custom_call.1} parent=5 // pred_check_branch
        %213 = sbr.rel (%p210) target = $region12
      $region11: #{tpu_custom_call.1} parent=5 // pred_region
        %s214 = ssub.s32 %s22, 1
        // Predicated region
        $region13: #{tpu_custom_call.1} parent=11 // pred_check
          %p215 = pneg %p69
        $region14: #{tpu_custom_call.1} parent=11 // pred_check_branch
          %217 = sbr.rel (%p215) target = $region16
        $region15: #{tpu_custom_call.1} parent=11 // pred_region
          %s219 = ssub.s32 256, 256
          %220 = vsyncadd [#allocation7], %s219
          %s221 = sshll.u32 [#allocation6], 4
          %s222 = int_to_ptr.vmem [resolvable:$true] %s221
          %227 = dma.hbm_to_vmem [thread:$0]  %s1, 256, %s222, [#allocation7], 64, 64, 4
        $region16: #{tpu_custom_call.1} parent=11 // pred_fallthru
          _
        // Predicated region
        $region17: #{tpu_custom_call.1} parent=11 // pred_check
          %p228 = pneg %p90
        $region18: #{tpu_custom_call.1} parent=11 // pred_check_branch
          %230 = sbr.rel (%p228) target = $region20
        $region19: #{tpu_custom_call.1} parent=11 // pred_region
          _
        $region20: #{tpu_custom_call.1} parent=11 // pred_fallthru
          _
        // Predicated region
        $region21: #{tpu_custom_call.1} parent=11 // pred_check
          %p231 = pneg %p111
        $region22: #{tpu_custom_call.1} parent=11 // pred_check_branch
          %233 = sbr.rel (%p231) target = $region24
        $region23: #{tpu_custom_call.1} parent=11 // pred_region
          %s235 = ssub.s32 256, 256
          %236 = vsyncadd [#allocation7], %s235
          %s237 = sshll.u32 [#allocation8], 4
          %s238 = int_to_ptr.vmem [resolvable:$true] %s237
          %243 = dma.hbm_to_vmem [thread:$0]  %s3, 256, %s238, [#allocation7], 64, 64, 4
        $region24: #{tpu_custom_call.1} parent=11 // pred_fallthru
          _
        // Predicated region
        $region25: #{tpu_custom_call.1} parent=11 // pred_check
          %p244 = pneg %p132
        $region26: #{tpu_custom_call.1} parent=11 // pred_check_branch
          %246 = sbr.rel (%p244) target = $region28
        $region27: #{tpu_custom_call.1} parent=11 // pred_region
          _
        $region28: #{tpu_custom_call.1} parent=11 // pred_fallthru
          _
        // Predicated region
        $region29: #{tpu_custom_call.1} parent=11 // pred_check
          %p247 = pneg %p153
        $region30: #{tpu_custom_call.1} parent=11 // pred_check_branch
          %249 = sbr.rel (%p247) target = $region32
        $region31: #{tpu_custom_call.1} parent=11 // pred_region
          _
        $region32: #{tpu_custom_call.1} parent=11 // pred_fallthru
          _
        // Predicated region
        $region33: #{tpu_custom_call.1} parent=11 // pred_check
          %p250 = pneg %p174
        $region34: #{tpu_custom_call.1} parent=11 // pred_check_branch
          %252 = sbr.rel (%p250) target = $region36
        $region35: #{tpu_custom_call.1} parent=11 // pred_region
          _
        $region36: #{tpu_custom_call.1} parent=11 // pred_fallthru
          _
      $region12: #{tpu_custom_call.1} parent=5 // pred_fallthru
        _
      %p253 = scmp.lt.s32.totalorder %s22, 2
      // Predicated region
      $region37: #{tpu_custom_call.1} parent=5 // pred_check
        %p254 = pneg %p253
      $region38: #{tpu_custom_call.1} parent=5 // pred_check_branch
        %256 = sbr.rel (%p254) target = $region40
      $region39: #{tpu_custom_call.1} parent=5 // pred_region
        // Predicated region
        $region41: #{tpu_custom_call.1} parent=39 // pred_check
          %p257 = pneg %p42
        $region42: #{tpu_custom_call.1} parent=39 // pred_check_branch
          %259 = sbr.rel (%p257) target = $region44
        $region43: #{tpu_custom_call.1} parent=39 // pred_region
          %s260 = sand.u32 %s32, 1
          %s261 = scalar_lea.sflag [#allocation4], %s260
          %s262 = sand.u32 %s32, 1
          %s263 = smul.addr %s262, 64
          %s264 = scalar_lea.vmem [#allocation3], %s263
          %s265 = smul.u32 8, %s22
          %s267 = ssub.s32 1024, 1024
          %268 = vsyncadd %s261, %s267
          %s269 = smul.addr %s265, 2
          %s270 = smul.addr %s269, 64
          %s271 = scalar_lea.hbm %s0, %s270
          %s272 = sshll.u32 %s264, 4
          %s273 = int_to_ptr.vmem [resolvable:$true] %s272
          %278 = dma.hbm_to_vmem [thread:$0]  %s271, 1024, %s273, %s261, 64, 64, 4
        $region44: #{tpu_custom_call.1} parent=39 // pred_fallthru
          _
      $region40: #{tpu_custom_call.1} parent=5 // pred_fallthru
        _
      %p279 = scmp.le.s32.totalorder 1, %s22
      %p280 = scmp.lt.s32.totalorder %s22, 3
      %p281 = pnand %p279, %p280
      %p282 = pneg %p281
      // Predicated region
      $region45: #{tpu_custom_call.1} parent=5 // pred_check
        _
      $region46: #{tpu_custom_call.1} parent=5 // pred_check_branch
        %284 = sbr.rel (%p281) target = $region48
      $region47: #{tpu_custom_call.1} parent=5 // pred_region
        %s285 = ssub.s32 %s22, 1
        %s286 = sand.u32 %s35, 1
        %s287 = scalar_lea.sflag [#allocation4], %s286
        %s288 = sand.u32 %s35, 1
        %s289 = smul.addr %s288, 64
        %s290 = scalar_lea.vmem [#allocation3], %s289
        // Predicated region
        $region49: #{tpu_custom_call.1} parent=47 // pred_check
          %p291 = pneg %p48
        $region50: #{tpu_custom_call.1} parent=47 // pred_check_branch
          %293 = sbr.rel (%p291) target = $region52
        $region51: #{tpu_custom_call.1} parent=47 // pred_region
          %294 = dma.done %s287, 1024
        $region52: #{tpu_custom_call.1} parent=47 // pred_fallthru
          _
        // Predicated region
        $region53: #{tpu_custom_call.1} parent=47 // pred_check
          %p295 = pneg %p69
        $region54: #{tpu_custom_call.1} parent=47 // pred_check_branch
          %297 = sbr.rel (%p295) target = $region56
        $region55: #{tpu_custom_call.1} parent=47 // pred_region
          %298 = dma.done [#allocation7], 256
        $region56: #{tpu_custom_call.1} parent=47 // pred_fallthru
          _
        // Predicated region
        $region57: #{tpu_custom_call.1} parent=47 // pred_check
          %p299 = pneg %p111
        $region58: #{tpu_custom_call.1} parent=47 // pred_check_branch
          %301 = sbr.rel (%p299) target = $region60
        $region59: #{tpu_custom_call.1} parent=47 // pred_region
          %302 = dma.done [#allocation7], 256
        $region60: #{tpu_custom_call.1} parent=47 // pred_fallthru
          _
        %s303 = sand.u32 %s35, 1
        %s304 = scalar_lea.sflag [#allocation4], %s303
        %s305 = sand.u32 %s35, 1
        %s306 = smul.addr %s305, 64
        %s307 = scalar_lea.vmem [#allocation3], %s306
        %p308 = pneg %p48
        %p309 = pneg %p45
        %p310 = pneg %p69
        %p311 = pneg %p66
        %p312 = pneg %p90
        %p313 = pneg %p87
        %p314 = pneg %p111
        %p315 = pneg %p108
        %p316 = pneg %p132
        %p317 = pneg %p129
        %p318 = pneg %p153
        %p319 = pneg %p150
        %p320 = pneg %p174
        %p321 = pneg %p171
        %p322 = pneg %p200
        %p323 = pneg %p197
        %s324 = sand.u32 %s187, 1
        %s325 = scalar_lea.sflag [#allocation5], %s324
        %s326 = sand.u32 %s187, 1
        %s327 = smul.addr %s326, 8
        %s328 = scalar_lea.vmem [#allocation9], %s327
        %s329 = smul.u32 8, %s27
        %v331 = vld [vmem:[%s290] sm:$0xf]
        %v332 = vld [vmem:[%s290 + $0x4] sm:$0xf]
        %v333 = vld [vmem:[%s290 + $0x8] sm:$0xf]
        %v334 = vld [vmem:[%s290 + $0xc] sm:$0xf]
        %v335 = vld [vmem:[%s290 + $0x10] sm:$0xf]
        %v336 = vld [vmem:[%s290 + $0x14] sm:$0xf]
        %v337 = vld [vmem:[%s290 + $0x18] sm:$0xf]
        %v338 = vld [vmem:[%s290 + $0x1c] sm:$0xf]
        %v339 = vld [vmem:[%s290 + $0x20] sm:$0xf]
        %v340 = vld [vmem:[%s290 + $0x24] sm:$0xf]
        %v341 = vld [vmem:[%s290 + $0x28] sm:$0xf]
        %v342 = vld [vmem:[%s290 + $0x2c] sm:$0xf]
        %v343 = vld [vmem:[%s290 + $0x30] sm:$0xf]
        %v344 = vld [vmem:[%s290 + $0x34] sm:$0xf]
        %v345 = vld [vmem:[%s290 + $0x38] sm:$0xf]
        %v346 = vld [vmem:[%s290 + $0x3c] sm:$0xf]
        %v347 = vld [vmem:[#allocation6] sm:$0xf]
        %v348 = vld [vmem:[#allocation6 + $0x4] sm:$0xf]
        %v349 = vld [vmem:[#allocation6 + $0x8] sm:$0xf]
        %v350 = vld [vmem:[#allocation6 + $0xc] sm:$0xf]
        %v351 = vld [vmem:[%s2] sm:$0x1]
        %v353 = vlaneseq
        %v354 = vshrl.u32 %v353, 7
        %v355 = vsub.s32 0, %v354
        %v356 = vrot.slane %v351, %v355
        %v374 = vunpack.c.l.b16 %v331
        %v375 = vunpack.c.l.b16 %v332
        %v376 = vunpack.c.l.b16 %v333
        %v377 = vunpack.c.l.b16 %v334
        %v378 = vunpack.c.l.b16 %v335
        %v379 = vunpack.c.l.b16 %v336
        %v380 = vunpack.c.l.b16 %v337
        %v381 = vunpack.c.l.b16 %v338
        %v382 = vunpack.c.l.b16 %v339
        %v383 = vunpack.c.l.b16 %v340
        %v384 = vunpack.c.l.b16 %v341
        %v385 = vunpack.c.l.b16 %v342
        %v386 = vunpack.c.l.b16 %v343
        %v387 = vunpack.c.l.b16 %v344
        %v388 = vunpack.c.l.b16 %v345
        %v389 = vunpack.c.l.b16 %v346
        %v390 = vpack.c.b16 %v375, %v374
        %v391 = vpack.c.b16 %v377, %v376
        %v392 = vpack.c.b16 %v379, %v378
        %v393 = vpack.c.b16 %v381, %v380
        %v394 = vpack.c.b16 %v383, %v382
        %v395 = vpack.c.b16 %v385, %v384
        %v396 = vpack.c.b16 %v387, %v386
        %v397 = vpack.c.b16 %v389, %v388
        %v402 = vunpack.c.l.b16 %v347
        %v403 = vunpack.c.l.b16 %v348
        %v404 = vunpack.c.l.b16 %v349
        %v405 = vunpack.c.l.b16 %v350
        %v406 = vpack.c.b16 %v403, %v402
        %v407 = vpack.c.b16 %v405, %v404
        %vm410 = vcmask 261120
        %v412 = vsel %vm410, %v390, 0
        %v415 = vsel %vm410, %v391, 0
        %v418 = vsel %vm410, %v392, 0
        %v421 = vsel %vm410, %v393, 0
        %v424 = vsel %vm410, %v394, 0
        %v427 = vsel %vm410, %v395, 0
        %v430 = vsel %vm410, %v396, 0
        %v433 = vsel %vm410, %v397, 0
        %435 = vmatprep.subr.bf16.mxu0 0
        %436 = vmatpush1.bf16.msra.mxu0 %v406
        %437 = vmatprep.subr.bf16.mxu0 0
        %438 = vmatpush1.bf16.msra.mxu0 %v407
        %439 = vmatprep.subr.bf16.mxu0 0
        %440 = vmatpush1.bf16.msra.mxu0 0
        %441 = vmatprep.subr.bf16.mxu0 0
        %442 = vmatpush1.bf16.msra.mxu0 0
        %443 = vmatprep.subr.bf16.mxu0 0
        %444 = vmatpush1.bf16.msra.mxu0 0
        %445 = vmatprep.subr.bf16.mxu0 0
        %446 = vmatpush1.bf16.msra.mxu0 0
        %447 = vmatprep.subr.bf16.mxu0 0
        %448 = vmatpush1.bf16.msra.mxu0 0
        %449 = vmatprep.subr.bf16.mxu0 0
        %450 = vmatpush1.bf16.msra.mxu0 0
        %451 = vmatprep.subr.bf16.mxu0 0
        %452 = vmatpush1.bf16.msra.mxu0 0
        %453 = vmatprep.subr.bf16.mxu0 0
        %454 = vmatpush1.bf16.msra.mxu0 0
        %455 = vmatprep.subr.bf16.mxu0 0
        %456 = vmatpush1.bf16.msra.mxu0 0
        %457 = vmatprep.subr.bf16.mxu0 0
        %458 = vmatpush1.bf16.msra.mxu0 0
        %459 = vmatprep.subr.bf16.mxu0 0
        %460 = vmatpush1.bf16.msra.mxu0 0
        %461 = vmatprep.subr.bf16.mxu0 0
        %462 = vmatpush1.bf16.msra.mxu0 0
        %463 = vmatprep.subr.bf16.mxu0 0
        %464 = vmatpush1.bf16.msra.mxu0 0
        %465 = vmatprep.subr.bf16.mxu0 0
        %466 = vmatpush1.bf16.msra.mxu0 0
        %467 = vmatprep.mubr.bf16.mxu0 0
        %468 = vmatmul.mubr.bf16.gmra.mrb[0].mxu0 %v412
        %v469 = vpop.f32.mrb[0].mxu0
        %v470 = vadd.f32 %v356, %v469
        %v471 = vpop.f32.mrb[0].mxu0
        %v472 = vpop.f32.mrb[0].mxu0
        %v473 = vadd.f32 %v356, %v472
        %v474 = vpop.f32.mrb[0].mxu0
        %475 = vmatprep.mubr.bf16.mxu0 0
        %476 = vmatmul.mubr.bf16.gmra.mrb[0].mxu0 %v415
        %v477 = vpop.f32.mrb[0].mxu0
        %v478 = vadd.f32 %v356, %v477
        %v479 = vpop.f32.mrb[0].mxu0
        %v480 = vpop.f32.mrb[0].mxu0
        %v481 = vadd.f32 %v356, %v480
        %v482 = vpop.f32.mrb[0].mxu0
        %483 = vmatprep.mubr.bf16.mxu0 0
        %484 = vmatmul.mubr.bf16.gmra.mrb[0].mxu0 %v418
        %v485 = vpop.f32.mrb[0].mxu0
        %v486 = vadd.f32 %v356, %v485
        %v487 = vpop.f32.mrb[0].mxu0
        %v488 = vpop.f32.mrb[0].mxu0
        %v489 = vadd.f32 %v356, %v488
        %v490 = vpop.f32.mrb[0].mxu0
        %491 = vmatprep.mubr.bf16.mxu0 0
        %492 = vmatmul.mubr.bf16.gmra.mrb[0].mxu0 %v421
        %v493 = vpop.f32.mrb[0].mxu0
        %v494 = vadd.f32 %v356, %v493
        %v495 = vpop.f32.mrb[0].mxu0
        %v496 = vpop.f32.mrb[0].mxu0
        %v497 = vadd.f32 %v356, %v496
        %v498 = vpop.f32.mrb[0].mxu0
        %499 = vmatprep.mubr.bf16.mxu0 0
        %500 = vmatmul.mubr.bf16.gmra.mrb[0].mxu0 %v424
        %v501 = vpop.f32.mrb[0].mxu0
        %v502 = vadd.f32 %v356, %v501
        %v503 = vpop.f32.mrb[0].mxu0
        %v504 = vpop.f32.mrb[0].mxu0
        %v505 = vadd.f32 %v356, %v504
        %v506 = vpop.f32.mrb[0].mxu0
        %507 = vmatprep.mubr.bf16.mxu0 0
        %508 = vmatmul.mubr.bf16.gmra.mrb[0].mxu0 %v427
        %v509 = vpop.f32.mrb[0].mxu0
        %v510 = vadd.f32 %v356, %v509
        %v511 = vpop.f32.mrb[0].mxu0
        %v512 = vpop.f32.mrb[0].mxu0
        %v513 = vadd.f32 %v356, %v512
        %v514 = vpop.f32.mrb[0].mxu0
        %515 = vmatprep.mubr.bf16.mxu0 0
        %516 = vmatmul.mubr.bf16.gmra.mrb[0].mxu0 %v430
        %v517 = vpop.f32.mrb[0].mxu0
        %v518 = vadd.f32 %v356, %v517
        %v519 = vpop.f32.mrb[0].mxu0
        %v520 = vpop.f32.mrb[0].mxu0
        %v521 = vadd.f32 %v356, %v520
        %v522 = vpop.f32.mrb[0].mxu0
        %523 = vmatprep.mubr.bf16.mxu0 0
        %524 = vmatmul.mubr.bf16.gmra.mrb[0].mxu0 %v433
        %v525 = vpop.f32.mrb[0].mxu0
        %v526 = vadd.f32 %v356, %v525
        %v527 = vpop.f32.mrb[0].mxu0
        %v528 = vpop.f32.mrb[0].mxu0
        %v529 = vadd.f32 %v356, %v528
        %v530 = vpop.f32.mrb[0].mxu0
        %531 = vdwg.mxu0
        %vm532 = vcmp.gt.f32.partialorder %v470, 0.0
        %vm533 = vcmp.gt.f32.partialorder %v473, 0.0
        %vm534 = vcmp.gt.f32.partialorder %v478, 0.0
        %vm535 = vcmp.gt.f32.partialorder %v481, 0.0
        %vm536 = vcmp.gt.f32.partialorder %v486, 0.0
        %vm537 = vcmp.gt.f32.partialorder %v489, 0.0
        %vm538 = vcmp.gt.f32.partialorder %v494, 0.0
        %vm539 = vcmp.gt.f32.partialorder %v497, 0.0
        %vm540 = vcmp.gt.f32.partialorder %v502, 0.0
        %vm541 = vcmp.gt.f32.partialorder %v505, 0.0
        %vm542 = vcmp.gt.f32.partialorder %v510, 0.0
        %vm543 = vcmp.gt.f32.partialorder %v513, 0.0
        %vm544 = vcmp.gt.f32.partialorder %v518, 0.0
        %vm545 = vcmp.gt.f32.partialorder %v521, 0.0
        %vm546 = vcmp.gt.f32.partialorder %v526, 0.0
        %vm547 = vcmp.gt.f32.partialorder %v529, 0.0
        %v548 = vmul.f32 %v470, 0.1
        %v549 = vmul.f32 %v473, 0.1
        %v550 = vmul.f32 %v478, 0.1
        %v551 = vmul.f32 %v481, 0.1
        %v552 = vmul.f32 %v486, 0.1
        %v553 = vmul.f32 %v489, 0.1
        %v554 = vmul.f32 %v494, 0.1
        %v555 = vmul.f32 %v497, 0.1
        %v556 = vmul.f32 %v502, 0.1
        %v557 = vmul.f32 %v505, 0.1
        %v558 = vmul.f32 %v510, 0.1
        %v559 = vmul.f32 %v513, 0.1
        %v560 = vmul.f32 %v518, 0.1
        %v561 = vmul.f32 %v521, 0.1
        %v562 = vmul.f32 %v526, 0.1
        %v563 = vmul.f32 %v529, 0.1
        %v564 = vsel %vm532, %v470, %v548
        %v565 = vsel %vm533, %v473, %v549
        %v566 = vsel %vm534, %v478, %v550
        %v567 = vsel %vm535, %v481, %v551
        %v568 = vsel %vm536, %v486, %v552
        %v569 = vsel %vm537, %v489, %v553
        %v570 = vsel %vm538, %v494, %v554
        %v571 = vsel %vm539, %v497, %v555
        %v572 = vsel %vm540, %v502, %v556
        %v573 = vsel %vm541, %v505, %v557
        %v574 = vsel %vm542, %v510, %v558
        %v575 = vsel %vm543, %v513, %v559
        %v576 = vsel %vm544, %v518, %v560
        %v577 = vsel %vm545, %v521, %v561
        %v578 = vsel %vm546, %v526, %v562
        %v579 = vsel %vm547, %v529, %v563
        %v580 = vpack.c.bf16 %v565, %v564
        %v581 = vpack.c.bf16 %v567, %v566
        %v582 = vpack.c.bf16 %v569, %v568
        %v583 = vpack.c.bf16 %v571, %v570
        %v584 = vpack.c.bf16 %v573, %v572
        %v585 = vpack.c.bf16 %v575, %v574
        %v586 = vpack.c.bf16 %v577, %v576
        %v587 = vpack.c.bf16 %v579, %v578
        %v588 = vld [vmem:[#allocation8] sm:$0xf]
        %v589 = vld [vmem:[#allocation8 + $0x4] sm:$0xf]
        %v590 = vld [vmem:[#allocation8 + $0x8] sm:$0xf]
        %v591 = vld [vmem:[#allocation8 + $0xc] sm:$0xf]
        %v592 = vld [vmem:[%s4] sm:$0x1]
        %v594 = vlaneseq
        %v595 = vshrl.u32 %v594, 7
        %v596 = vsub.s32 0, %v595
        %v597 = vrot.slane %v592, %v596
        %v603 = vunpack.c.l.b16 %v588
        %v604 = vunpack.c.l.b16 %v589
        %v605 = vunpack.c.l.b16 %v590
        %v606 = vunpack.c.l.b16 %v591
        %v607 = vpack.c.b16 %v604, %v603
        %v608 = vpack.c.b16 %v606, %v605
        %v612 = vsel %vm410, %v580, 0
        %v615 = vsel %vm410, %v581, 0
        %v618 = vsel %vm410, %v582, 0
        %v621 = vsel %vm410, %v583, 0
        %v624 = vsel %vm410, %v584, 0
        %v627 = vsel %vm410, %v585, 0
        %v630 = vsel %vm410, %v586, 0
        %v633 = vsel %vm410, %v587, 0
        %635 = vmatprep.subr.bf16.mxu0 0
        %636 = vmatpush1.bf16.msra.mxu0 %v607
        %637 = vmatprep.subr.bf16.mxu0 0
        %638 = vmatpush1.bf16.msra.mxu0 %v608
        %639 = vmatprep.subr.bf16.mxu0 0
        %640 = vmatpush1.bf16.msra.mxu0 0
        %641 = vmatprep.subr.bf16.mxu0 0
        %642 = vmatpush1.bf16.msra.mxu0 0
        %643 = vmatprep.subr.bf16.mxu0 0
        %644 = vmatpush1.bf16.msra.mxu0 0
        %645 = vmatprep.subr.bf16.mxu0 0
        %646 = vmatpush1.bf16.msra.mxu0 0
        %647 = vmatprep.subr.bf16.mxu0 0
        %648 = vmatpush1.bf16.msra.mxu0 0
        %649 = vmatprep.subr.bf16.mxu0 0
        %650 = vmatpush1.bf16.msra.mxu0 0
        %651 = vmatprep.subr.bf16.mxu0 0
        %652 = vmatpush1.bf16.msra.mxu0 0
        %653 = vmatprep.subr.bf16.mxu0 0
        %654 = vmatpush1.bf16.msra.mxu0 0
        %655 = vmatprep.subr.bf16.mxu0 0
        %656 = vmatpush1.bf16.msra.mxu0 0
        %657 = vmatprep.subr.bf16.mxu0 0
        %658 = vmatpush1.bf16.msra.mxu0 0
        %659 = vmatprep.subr.bf16.mxu0 0
        %660 = vmatpush1.bf16.msra.mxu0 0
        %661 = vmatprep.subr.bf16.mxu0 0
        %662 = vmatpush1.bf16.msra.mxu0 0
        %663 = vmatprep.subr.bf16.mxu0 0
        %664 = vmatpush1.bf16.msra.mxu0 0
        %665 = vmatprep.subr.bf16.mxu0 0
        %666 = vmatpush1.bf16.msra.mxu0 0
        %667 = vmatprep.mubr.bf16.mxu0 0
        %668 = vmatmul.mubr.bf16.gmra.mrb[0].mxu0 %v612
        %v669 = vpop.f32.mrb[0].mxu0
        %v670 = vadd.f32 %v597, %v669
        %v671 = vpop.f32.mrb[0].mxu0
        %v672 = vpop.f32.mrb[0].mxu0
        %v673 = vadd.f32 %v597, %v672
        %v674 = vpop.f32.mrb[0].mxu0
        %675 = vmatprep.mubr.bf16.mxu0 0
        %676 = vmatmul.mubr.bf16.gmra.mrb[0].mxu0 %v615
        %v677 = vpop.f32.mrb[0].mxu0
        %v678 = vadd.f32 %v597, %v677
        %v679 = vpop.f32.mrb[0].mxu0
        %v680 = vpop.f32.mrb[0].mxu0
        %v681 = vadd.f32 %v597, %v680
        %v682 = vpop.f32.mrb[0].mxu0
        %683 = vmatprep.mubr.bf16.mxu0 0
        %684 = vmatmul.mubr.bf16.gmra.mrb[0].mxu0 %v618
        %v685 = vpop.f32.mrb[0].mxu0
        %v686 = vadd.f32 %v597, %v685
        %v687 = vpop.f32.mrb[0].mxu0
        %v688 = vpop.f32.mrb[0].mxu0
        %v689 = vadd.f32 %v597, %v688
        %v690 = vpop.f32.mrb[0].mxu0
        %691 = vmatprep.mubr.bf16.mxu0 0
        %692 = vmatmul.mubr.bf16.gmra.mrb[0].mxu0 %v621
        %v693 = vpop.f32.mrb[0].mxu0
        %v694 = vadd.f32 %v597, %v693
        %v695 = vpop.f32.mrb[0].mxu0
        %v696 = vpop.f32.mrb[0].mxu0
        %v697 = vadd.f32 %v597, %v696
        %v698 = vpop.f32.mrb[0].mxu0
        %699 = vmatprep.mubr.bf16.mxu0 0
        %700 = vmatmul.mubr.bf16.gmra.mrb[0].mxu0 %v624
        %v701 = vpop.f32.mrb[0].mxu0
        %v702 = vadd.f32 %v597, %v701
        %v703 = vpop.f32.mrb[0].mxu0
        %v704 = vpop.f32.mrb[0].mxu0
        %v705 = vadd.f32 %v597, %v704
        %v706 = vpop.f32.mrb[0].mxu0
        %707 = vmatprep.mubr.bf16.mxu0 0
        %708 = vmatmul.mubr.bf16.gmra.mrb[0].mxu0 %v627
        %v709 = vpop.f32.mrb[0].mxu0
        %v710 = vadd.f32 %v597, %v709
        %v711 = vpop.f32.mrb[0].mxu0
        %v712 = vpop.f32.mrb[0].mxu0
        %v713 = vadd.f32 %v597, %v712
        %v714 = vpop.f32.mrb[0].mxu0
        %715 = vmatprep.mubr.bf16.mxu0 0
        %716 = vmatmul.mubr.bf16.gmra.mrb[0].mxu0 %v630
        %v717 = vpop.f32.mrb[0].mxu0
        %v718 = vadd.f32 %v597, %v717
        %v719 = vpop.f32.mrb[0].mxu0
        %v720 = vpop.f32.mrb[0].mxu0
        %v721 = vadd.f32 %v597, %v720
        %v722 = vpop.f32.mrb[0].mxu0
        %723 = vmatprep.mubr.bf16.mxu0 0
        %724 = vmatmul.mubr.bf16.gmra.mrb[0].mxu0 %v633
        %v725 = vpop.f32.mrb[0].mxu0
        %v726 = vadd.f32 %v597, %v725
        %v727 = vpop.f32.mrb[0].mxu0
        %v728 = vpop.f32.mrb[0].mxu0
        %v729 = vadd.f32 %v597, %v728
        %v730 = vpop.f32.mrb[0].mxu0
        %731 = vdwg.mxu0
        %vm732 = vcmp.gt.f32.partialorder %v670, 0.0
        %vm733 = vcmp.gt.f32.partialorder %v673, 0.0
        %vm734 = vcmp.gt.f32.partialorder %v678, 0.0
        %vm735 = vcmp.gt.f32.partialorder %v681, 0.0
        %vm736 = vcmp.gt.f32.partialorder %v686, 0.0
        %vm737 = vcmp.gt.f32.partialorder %v689, 0.0
        %vm738 = vcmp.gt.f32.partialorder %v694, 0.0
        %vm739 = vcmp.gt.f32.partialorder %v697, 0.0
        %vm740 = vcmp.gt.f32.partialorder %v702, 0.0
        %vm741 = vcmp.gt.f32.partialorder %v705, 0.0
        %vm742 = vcmp.gt.f32.partialorder %v710, 0.0
        %vm743 = vcmp.gt.f32.partialorder %v713, 0.0
        %vm744 = vcmp.gt.f32.partialorder %v718, 0.0
        %vm745 = vcmp.gt.f32.partialorder %v721, 0.0
        %vm746 = vcmp.gt.f32.partialorder %v726, 0.0
        %vm747 = vcmp.gt.f32.partialorder %v729, 0.0
        %v748 = vmul.f32 %v670, 0.1
        %v749 = vmul.f32 %v673, 0.1
        %v750 = vmul.f32 %v678, 0.1
        %v751 = vmul.f32 %v681, 0.1
        %v752 = vmul.f32 %v686, 0.1
        %v753 = vmul.f32 %v689, 0.1
        %v754 = vmul.f32 %v694, 0.1
        %v755 = vmul.f32 %v697, 0.1
        %v756 = vmul.f32 %v702, 0.1
        %v757 = vmul.f32 %v705, 0.1
        %v758 = vmul.f32 %v710, 0.1
        %v759 = vmul.f32 %v713, 0.1
        %v760 = vmul.f32 %v718, 0.1
        %v761 = vmul.f32 %v721, 0.1
        %v762 = vmul.f32 %v726, 0.1
        %v763 = vmul.f32 %v729, 0.1
        %v764 = vsel %vm732, %v670, %v748
        %v765 = vsel %vm733, %v673, %v749
        %v766 = vsel %vm734, %v678, %v750
        %v767 = vsel %vm735, %v681, %v751
        %v768 = vsel %vm736, %v686, %v752
        %v769 = vsel %vm737, %v689, %v753
        %v770 = vsel %vm738, %v694, %v754
        %v771 = vsel %vm739, %v697, %v755
        %v772 = vsel %vm740, %v702, %v756
        %v773 = vsel %vm741, %v705, %v757
        %v774 = vsel %vm742, %v710, %v758
        %v775 = vsel %vm743, %v713, %v759
        %v776 = vsel %vm744, %v718, %v760
        %v777 = vsel %vm745, %v721, %v761
        %v778 = vsel %vm746, %v726, %v762
        %v779 = vsel %vm747, %v729, %v763
        %v780 = vld [vmem:[%s5] sm:$0x1]
        %v782 = vlaneseq
        %v783 = vshrl.u32 %v782, 7
        %v784 = vsub.s32 0, %v783
        %v785 = vrot.slane %v780, %v784
        %v787 = vmul.f32 %v764, %v785
        %v788 = vmul.f32 %v765, %v785
        %v789 = vmul.f32 %v766, %v785
        %v790 = vmul.f32 %v767, %v785
        %v791 = vmul.f32 %v768, %v785
        %v792 = vmul.f32 %v769, %v785
        %v793 = vmul.f32 %v770, %v785
        %v794 = vmul.f32 %v771, %v785
        %v795 = vmul.f32 %v772, %v785
        %v796 = vmul.f32 %v773, %v785
        %v797 = vmul.f32 %v774, %v785
        %v798 = vmul.f32 %v775, %v785
        %v799 = vmul.f32 %v776, %v785
        %v800 = vmul.f32 %v777, %v785
        %v801 = vmul.f32 %v778, %v785
        %v802 = vmul.f32 %v779, %v785
        %v803 = vsel %vm410, %v787, 0.0
        %804 = vadd.xlane.f32.xlu0 %v803
        %v805 = vpop.xlane.xlu0 %804
        %v806 = vsel %vm410, %v788, 0.0
        %807 = vadd.xlane.f32.xlu0 %v806
        %v808 = vpop.xlane.xlu0 %807
        %v809 = vsel %vm410, %v789, 0.0
        %810 = vadd.xlane.f32.xlu0 %v809
        %v811 = vpop.xlane.xlu0 %810
        %v812 = vsel %vm410, %v790, 0.0
        %813 = vadd.xlane.f32.xlu0 %v812
        %v814 = vpop.xlane.xlu0 %813
        %v815 = vsel %vm410, %v791, 0.0
        %816 = vadd.xlane.f32.xlu0 %v815
        %v817 = vpop.xlane.xlu0 %816
        %v818 = vsel %vm410, %v792, 0.0
        %819 = vadd.xlane.f32.xlu0 %v818
        %v820 = vpop.xlane.xlu0 %819
        %v821 = vsel %vm410, %v793, 0.0
        %822 = vadd.xlane.f32.xlu0 %v821
        %v823 = vpop.xlane.xlu0 %822
        %v824 = vsel %vm410, %v794, 0.0
        %825 = vadd.xlane.f32.xlu0 %v824
        %v826 = vpop.xlane.xlu0 %825
        %v827 = vsel %vm410, %v795, 0.0
        %828 = vadd.xlane.f32.xlu0 %v827
        %v829 = vpop.xlane.xlu0 %828
        %v830 = vsel %vm410, %v796, 0.0
        %831 = vadd.xlane.f32.xlu0 %v830
        %v832 = vpop.xlane.xlu0 %831
        %v833 = vsel %vm410, %v797, 0.0
        %834 = vadd.xlane.f32.xlu0 %v833
        %v835 = vpop.xlane.xlu0 %834
        %v836 = vsel %vm410, %v798, 0.0
        %837 = vadd.xlane.f32.xlu0 %v836
        %v838 = vpop.xlane.xlu0 %837
        %v839 = vsel %vm410, %v799, 0.0
        %840 = vadd.xlane.f32.xlu0 %v839
        %v841 = vpop.xlane.xlu0 %840
        %v842 = vsel %vm410, %v800, 0.0
        %843 = vadd.xlane.f32.xlu0 %v842
        %v844 = vpop.xlane.xlu0 %843
        %v845 = vsel %vm410, %v801, 0.0
        %846 = vadd.xlane.f32.xlu0 %v845
        %v847 = vpop.xlane.xlu0 %846
        %v848 = vsel %vm410, %v802, 0.0
        %849 = vadd.xlane.f32.xlu0 %v848
        %v850 = vpop.xlane.xlu0 %849
        %v867 = vlaneseq
        %v868 = vand.u32 %v867, 127
        %v869 = vlaneseq
        %v870 = vshrl.u32 %v869, 7
        %v871 = vsub.s32 %v868, %v870
        %v872 = vrot.slane %v805, %v871
        %v873 = vadd.s32 %v868, 4294967288
        %v874 = vlaneseq
        %v875 = vshrl.u32 %v874, 7
        %v876 = vsub.s32 %v873, %v875
        %v877 = vrot.slane %v808, %v876
        %vm878 = vcmask 130112
        %v879 = vsel %vm878, %v877, %v872
        %v880 = vlaneseq
        %v881 = vshrl.u32 %v880, 7
        %v882 = vsub.s32 %v868, %v881
        %v883 = vrot.slane %v811, %v882
        %v884 = vlaneseq
        %v885 = vshrl.u32 %v884, 7
        %v886 = vsub.s32 %v873, %v885
        %v887 = vrot.slane %v814, %v886
        %v888 = vsel %vm878, %v887, %v883
        %v889 = vlaneseq
        %v890 = vshrl.u32 %v889, 7
        %v891 = vsub.s32 %v868, %v890
        %v892 = vrot.slane %v817, %v891
        %v893 = vlaneseq
        %v894 = vshrl.u32 %v893, 7
        %v895 = vsub.s32 %v873, %v894
        %v896 = vrot.slane %v820, %v895
        %v897 = vsel %vm878, %v896, %v892
        %v898 = vlaneseq
        %v899 = vshrl.u32 %v898, 7
        %v900 = vsub.s32 %v868, %v899
        %v901 = vrot.slane %v823, %v900
        %v902 = vlaneseq
        %v903 = vshrl.u32 %v902, 7
        %v904 = vsub.s32 %v873, %v903
        %v905 = vrot.slane %v826, %v904
        %v906 = vsel %vm878, %v905, %v901
        %v907 = vlaneseq
        %v908 = vshrl.u32 %v907, 7
        %v909 = vsub.s32 %v868, %v908
        %v910 = vrot.slane %v829, %v909
        %v911 = vlaneseq
        %v912 = vshrl.u32 %v911, 7
        %v913 = vsub.s32 %v873, %v912
        %v914 = vrot.slane %v832, %v913
        %v915 = vsel %vm878, %v914, %v910
        %v916 = vlaneseq
        %v917 = vshrl.u32 %v916, 7
        %v918 = vsub.s32 %v868, %v917
        %v919 = vrot.slane %v835, %v918
        %v920 = vlaneseq
        %v921 = vshrl.u32 %v920, 7
        %v922 = vsub.s32 %v873, %v921
        %v923 = vrot.slane %v838, %v922
        %v924 = vsel %vm878, %v923, %v919
        %v925 = vlaneseq
        %v926 = vshrl.u32 %v925, 7
        %v927 = vsub.s32 %v868, %v926
        %v928 = vrot.slane %v841, %v927
        %v929 = vlaneseq
        %v930 = vshrl.u32 %v929, 7
        %v931 = vsub.s32 %v873, %v930
        %v932 = vrot.slane %v844, %v931
        %v933 = vsel %vm878, %v932, %v928
        %v934 = vlaneseq
        %v935 = vshrl.u32 %v934, 7
        %v936 = vsub.s32 %v868, %v935
        %v937 = vrot.slane %v847, %v936
        %v938 = vlaneseq
        %v939 = vshrl.u32 %v938, 7
        %v940 = vsub.s32 %v873, %v939
        %v941 = vrot.slane %v850, %v940
        %v942 = vsel %vm878, %v941, %v937
        %vm943 = vcmask 1041409
        %v944 = vsel %vm943, %v888, %v879
        %vm945 = vcmask 1042434
        %v946 = vsel %vm945, %v897, %v944
        %vm947 = vcmask 1043459
        %v948 = vsel %vm947, %v906, %v946
        %vm949 = vcmask 1044484
        %v950 = vsel %vm949, %v915, %v948
        %vm951 = vcmask 1045509
        %v952 = vsel %vm951, %v924, %v950
        %vm953 = vcmask 1046534
        %v954 = vsel %vm953, %v933, %v952
        %vm955 = vcmask 1047559
        %v956 = vsel %vm955, %v942, %v954
        %vm958 = vcmask 130048
        %v959 = vsel %vm958, %v956, -inf
        %960 = vmax.xlane.f32.xlu0 %v959
        %v961 = vpop.xlane.xlu0 %960
        %v962 = vld [vmem:[#allocation2] sm:$0x1]
        %v964 = vlaneseq
        %v965 = vshrl.u32 %v964, 7
        %v966 = vsub.s32 0, %v965
        %v967 = vrot.slane %v962, %v966
        %v969 = vadd.f32 %v961, %v967
        %971 = vset.pattern.permute.xlu0 0
        %972 = vperm.xlu0 %971, %v969
        %v973 = vpop.permute.xlu0 %972
        %975 = vst [vmem:[%s328] sm:$0xff] %v973
        %s976 = sand.u32 %s187, 1
        %s977 = scalar_lea.sflag [#allocation5], %s976
        %s978 = sand.u32 %s187, 1
        %s979 = smul.addr %s978, 8
        %s980 = scalar_lea.vmem [#allocation9], %s979
        // Predicated region
        $region61: #{tpu_custom_call.1} parent=47 // pred_check
          %p981 = pneg %p197
        $region62: #{tpu_custom_call.1} parent=47 // pred_check_branch
          %983 = sbr.rel (%p981) target = $region64
        $region63: #{tpu_custom_call.1} parent=47 // pred_region
          %s985 = ssub.s32 128, 128
          %986 = vsyncadd %s977, %s985
          %s987 = smul.addr %s27, 128
          %s988 = scalar_lea.hbm %s7, %s987
          %s990 = sshll.u32 %s980, 4
          %s991 = int_to_ptr.vmem [resolvable:$true] %s990
          %993 = dma.vmem_to_hbm [thread:$0]  %s991, 128, %s988, %s977
        $region64: #{tpu_custom_call.1} parent=47 // pred_fallthru
          _
      $region48: #{tpu_custom_call.1} parent=5 // pred_fallthru
        _
      %p994 = scmp.le.s32.totalorder 2, %s22
      // Predicated region
      $region65: #{tpu_custom_call.1} parent=5 // pred_check
        %p995 = pneg %p994
      $region66: #{tpu_custom_call.1} parent=5 // pred_check_branch
        %997 = sbr.rel (%p995) target = $region68
      $region67: #{tpu_custom_call.1} parent=5 // pred_region
        %s998 = ssub.s32 %s22, 2
        // Predicated region
        $region69: #{tpu_custom_call.1} parent=67 // pred_check
          %p999 = pneg %p203
        $region70: #{tpu_custom_call.1} parent=67 // pred_check_branch
          %1001 = sbr.rel (%p999) target = $region72
        $region71: #{tpu_custom_call.1} parent=67 // pred_region
          %s1002 = sand.u32 %s188, 1
          %s1003 = scalar_lea.sflag [#allocation5], %s1002
          %s1004 = sand.u32 %s188, 1
          %s1005 = smul.addr %s1004, 8
          %s1006 = scalar_lea.vmem [#allocation9], %s1005
          %1007 = dma.done %s1003, 128
        $region72: #{tpu_custom_call.1} parent=67 // pred_fallthru
          _
      $region68: #{tpu_custom_call.1} parent=5 // pred_fallthru
        _
    $region6: #{tpu_custom_call.1} parent=1 // loop_footer
      %s26 = sadd.s32 1, %s22
    $region7: #{tpu_custom_call.1} parent=1 // loop_footer_branch
      %21 = sbr.rel target = $region3
    $region8: #{tpu_custom_call.1} parent=1 // loop_exit
      _
    %1008 = vsyncpa [#allocation4], 1
    %s1009 = scalar_lea.sflag [#allocation4], 1
    %1010 = vsyncpa %s1009, 1
    %1011 = vsyncpa [#allocation7], 1
    %1012 = vsyncpa [#allocation5], 1
    %s1013 = scalar_lea.sflag [#allocation5], 1
    %1014 = vsyncpa %s1013, 1

</llo_original>
